<compile_context>
chip_gen: v6e
topology: v6e:2x2x1
jax: 0.10.0
libtpu: 0.0.40
codegen_flags: <defaults>
</compile_context>

<pallas_src>
import functools
import math

import jax
import jax.numpy as jnp
from jax.experimental import pallas as pl
from jax.experimental.pallas import tpu as pltpu


def _round_up(x, m):
    return (x + m - 1) // m * m


def _gelu_exact(x):
    # transformers ACT2FN["gelu"] == exact erf-based gelu
    return 0.5 * x * (1.0 + jax.lax.erf(x * (1.0 / math.sqrt(2.0))))


# ---------------------------------------------------------------------------
# Kernel 1: BertPredictionHeadTransform (dense H->H + GELU + LayerNorm) with
# bf16 output, plus the NSP head folded in (computed once at grid step 0).
# Grid axis is "arbitrary" (sequential) so the constant-index NSP output block
# is written exactly once — no megacore write race.
# ---------------------------------------------------------------------------
def transform_nsp_kernel(x_ref, wt_ref, bt_ref, gamma_ref, beta_ref,
                         pooled_ref, wnsp_ref, bnsp_ref,
                         h_ref, nsp_ref, *, eps):
    # x: [tm, H] f32 (cast to bf16 for the MXU); wt: [H, H] bf16
    x = x_ref[...].astype(jnp.bfloat16)
    h = jnp.dot(x, wt_ref[...], preferred_element_type=jnp.float32) + bt_ref[...]
    h = _gelu_exact(h)
    mean = jnp.mean(h, axis=-1, keepdims=True)
    cent = h - mean
    var = jnp.mean(cent * cent, axis=-1, keepdims=True)
    h = cent * jax.lax.rsqrt(var + eps)
    h = h * gamma_ref[...] + beta_ref[...]
    h_ref[...] = h.astype(h_ref.dtype)

    @pl.when(pl.program_id(0) == 0)
    def _():
        # NSP head: pooled [B,H] f32 @ Wnsp [H,128] f32 + b (lane-padded 2->128)
        nsp_ref[...] = (jnp.dot(pooled_ref[...], wnsp_ref[...],
                                preferred_element_type=jnp.float32)
                        + bnsp_ref[...])


# ---------------------------------------------------------------------------
# Kernel 2: decoder matmul h[M,H] @ Wdec[H,V] + b.  Grid = (V tiles, M tiles):
# the decoder-weight block index depends only on the OUTER V index, so each
# weight tile is DMA'd from HBM exactly once.  Output is bf16.
# ---------------------------------------------------------------------------
def decoder_kernel(h_ref, wdec_ref, bdec_ref, out_ref):
    out_ref[...] = (jnp.dot(h_ref[...], wdec_ref[...],
                            preferred_element_type=jnp.float32)
                    + bdec_ref[...]).astype(out_ref.dtype)


def _default_tiles():
    """(tm, tv, vmem_limit_cap) keyed off physical VMEM size per generation."""
    vmem_bytes = None
    try:
        vmem_bytes = int(pltpu.get_tpu_info().vmem_capacity_bytes)
    except Exception:
        pass
    if vmem_bytes is None:
        try:
            kind = jax.devices()[0].device_kind.lower()
            vmem_bytes = (128 << 20) if ("v5" in kind or "v6" in kind) else (64 << 20)
        except Exception:
            vmem_bytes = 64 << 20
    if vmem_bytes >= (100 << 20):        # v5e / v6e: 128 MiB physical VMEM
        return 2048, 2048, (96 << 20)
    return 1024, 2048, (52 << 20)        # v7x: 64 MiB per-TC VMEM


def _pick_tv(v_pad, target):
    """Largest multiple of 128 that is <= target and divides v_pad."""
    tv = max(128, (min(target, v_pad) // 128) * 128)
    while v_pad % tv != 0:
        tv -= 128
    return tv


def prepare_params(params):
    """Pad / cast the weights ONCE (outside the per-step call)."""
    H = params["transform_w"].shape[0]
    V = params["decoder_w"].shape[1]
    v_pad = _round_up(V, 256)            # minimal lane-dense padding
    wdec = params["decoder_w"]
    bdec = params["decoder_b"]
    if v_pad != V:
        wdec = jnp.pad(wdec, ((0, 0), (0, v_pad - V)))
        bdec = jnp.pad(bdec, ((0, v_pad - V),))
    nsp_lanes = 128
    w_nsp = jnp.pad(params["seq_rel_w"],
                    ((0, 0), (0, nsp_lanes - params["seq_rel_w"].shape[1])))
    b_nsp = jnp.pad(params["seq_rel_b"],
                    ((0, nsp_lanes - params["seq_rel_b"].shape[0]),))
    return {
        "hidden_size": H,
        "vocab_size": V,
        "transform_w_bf16": params["transform_w"].astype(jnp.bfloat16),
        "transform_b": params["transform_b"].reshape(1, H).astype(jnp.float32),
        "ln_gamma": params["ln_gamma"].reshape(1, H).astype(jnp.float32),
        "ln_beta": params["ln_beta"].reshape(1, H).astype(jnp.float32),
        "decoder_w_bf16": wdec.astype(jnp.bfloat16),
        "decoder_b": bdec.reshape(1, v_pad).astype(jnp.float32),
        "seq_rel_w": w_nsp.astype(jnp.float32),
        "seq_rel_b": b_nsp.reshape(1, nsp_lanes).astype(jnp.float32),
    }


def bert_pretraining_heads(sequence_output, pooled_output, prepared, *,
                           eps=1e-12, tm=None, tv=None,
                           logits_dtype=jnp.bfloat16, return_padded=False):
    B, S, H = sequence_output.shape
    M = B * S
    V = prepared["vocab_size"]
    v_pad = prepared["decoder_w_bf16"].shape[1]
    nsp_lanes = prepared["seq_rel_w"].shape[1]

    d_tm, d_tv, vmem_cap = _default_tiles()
    tm = d_tm if tm is None else tm
    tv = d_tv if tv is None else tv
    tm = min(tm, _round_up(M, 8))
    # keep >= 2 M tiles when sensible so v7x's two TensorCores both get work
    if tm >= M and M >= 256:
        tm = _round_up((M + 1) // 2, 8)
    tv = _pick_tv(v_pad, tv)
    m_pad = _round_up(M, tm)

    x2d = sequence_output.reshape(M, H).astype(jnp.float32)
    if m_pad != M:
        x2d = jnp.pad(x2d, ((0, m_pad - M), (0, 0)))
    pooled = pooled_output.astype(jnp.float32)

    # ---- kernel 1: transform (+ folded NSP head) -> bf16 h [m_pad, H]
    grid1 = (m_pad // tm,)
    vmem1_est = (2 * tm * H * (4 + 2)                     # x (f32) + h (bf16), dbl-buffered
                 + 2 * H * H * 2                          # transform W (bf16)
                 + 2 * 4 * H * 4                          # bias / gamma / beta
                 + 2 * (B * H * 4 + H * nsp_lanes * 4
                        + nsp_lanes * 4 + B * nsp_lanes * 4))
    vmem1_limit = int(min(vmem_cap, max(32 << 20, 2 * vmem1_est)))
    cost1 = pl.CostEstimate(
        flops=2 * m_pad * H * H + 2 * B * H * nsp_lanes,
        transcendentals=m_pad * H,
        bytes_accessed=m_pad * H * 4 + H * H * 2 + m_pad * H * 2 + B * H * 4)

    h, nsp = pl.pallas_call(
        functools.partial(transform_nsp_kernel, eps=eps),
        out_shape=(jax.ShapeDtypeStruct((m_pad, H), jnp.bfloat16),
                   jax.ShapeDtypeStruct((B, nsp_lanes), jnp.float32)),
        grid=grid1,
        in_specs=[
            pl.BlockSpec((tm, H), lambda i: (i, 0)),          # x tile
            pl.BlockSpec((H, H), lambda i: (0, 0)),           # transform W
            pl.BlockSpec((1, H), lambda i: (0, 0)),           # transform b
            pl.BlockSpec((1, H), lambda i: (0, 0)),           # LN gamma
            pl.BlockSpec((1, H), lambda i: (0, 0)),           # LN beta
            pl.BlockSpec((B, H), lambda i: (0, 0)),           # pooled
            pl.BlockSpec((H, nsp_lanes), lambda i: (0, 0)),   # NSP W (padded)
            pl.BlockSpec((1, nsp_lanes), lambda i: (0, 0)),   # NSP b (padded)
        ],
        out_specs=[pl.BlockSpec((tm, H), lambda i: (i, 0)),
                   pl.BlockSpec((B, nsp_lanes), lambda i: (0, 0))],
        compiler_params=pltpu.CompilerParams(
            dimension_semantics=("arbitrary",),
            vmem_limit_bytes=vmem1_limit),
        cost_estimate=cost1,
    )(x2d, prepared["transform_w_bf16"], prepared["transform_b"],
      prepared["ln_gamma"], prepared["ln_beta"],
      pooled, prepared["seq_rel_w"], prepared["seq_rel_b"])

    # ---- kernel 2: decoder matmul, V-outer grid (weights stream from HBM once)
    grid2 = (v_pad // tv, m_pad // tm)
    out_bytes = jnp.dtype(logits_dtype).itemsize
    vmem2_est = 2 * (tm * H * 2 + H * tv * 2 + tv * 4 + tm * tv * out_bytes)
    vmem2_limit = int(min(vmem_cap, max(32 << 20, 2 * vmem2_est)))
    cost2 = pl.CostEstimate(
        flops=2 * m_pad * H * v_pad,
        transcendentals=0,
        bytes_accessed=(grid2[0] * m_pad * H * 2 + H * v_pad * 2 + v_pad * 4
                        + m_pad * v_pad * out_bytes))

    logits = pl.pallas_call(
        decoder_kernel,
        out_shape=jax.ShapeDtypeStruct((m_pad, v_pad), logits_dtype),
        grid=grid2,
        in_specs=[
            pl.BlockSpec((tm, H), lambda j, i: (i, 0)),    # h tile (inner M)
            pl.BlockSpec((H, tv), lambda j, i: (0, j)),    # decoder W tile (outer V)
            pl.BlockSpec((1, tv), lambda j, i: (0, j)),    # decoder b tile
        ],
        out_specs=pl.BlockSpec((tm, tv), lambda j, i: (i, j)),
        compiler_params=pltpu.CompilerParams(
            dimension_semantics=("parallel", "parallel"),
            vmem_limit_bytes=vmem2_limit),
        cost_estimate=cost2,
    )(h, prepared["decoder_w_bf16"], prepared["decoder_b"])

    seq_relationship_score = nsp[:, :2]
    if return_padded:
        # Padded vocab columns carry logit 0 and padded M rows are filler:
        # mask both in the loss.  This path avoids the slice/reshape copy.
        return logits, seq_relationship_score
    prediction_scores = logits[:M, :V].reshape(B, S, V)
    return prediction_scores, seq_relationship_score


def init_params(key, hidden_size, vocab_size):
    ks = jax.random.split(key, 8)
    std = 0.02
    return {
        # stored as [in, out] (i.e. PyTorch weight.T)
        "transform_w": jax.random.normal(ks[0], (hidden_size, hidden_size), jnp.float32) * std,
        "transform_b": jax.random.normal(ks[1], (hidden_size,), jnp.float32) * std,
        "ln_gamma": 1.0 + 0.1 * jax.random.normal(ks[2], (hidden_size,), jnp.float32),
        "ln_beta": 0.1 * jax.random.normal(ks[3], (hidden_size,), jnp.float32),
        "decoder_w": jax.random.normal(ks[4], (hidden_size, vocab_size), jnp.float32) * std,
        "decoder_b": jax.random.normal(ks[5], (vocab_size,), jnp.float32) * std,
        "seq_rel_w": jax.random.normal(ks[6], (hidden_size, 2), jnp.float32) * std,
        "seq_rel_b": jax.random.normal(ks[7], (2,), jnp.float32) * std,
    }


def reference(sequence_output, pooled_output, params, eps=1e-12):
    # pure-JAX f32 reference of the PyTorch module semantics
    h = sequence_output @ params["transform_w"] + params["transform_b"]
    h = _gelu_exact(h)
    mean = jnp.mean(h, axis=-1, keepdims=True)
    var = jnp.mean((h - mean) ** 2, axis=-1, keepdims=True)
    h = (h - mean) / jnp.sqrt(var + eps) * params["ln_gamma"] + params["ln_beta"]
    pred = h @ params["decoder_w"] + params["decoder_b"]
    nsp = pooled_output @ params["seq_rel_w"] + params["seq_rel_b"]
    return pred, nsp


if __name__ == "__main__":
    # small BERT-like config; V deliberately not a multiple of 128 to exercise
    # the lane-padding / slicing path.
    B, S, H, V = 2, 8, 32, 100

    key = jax.random.PRNGKey(0)
    k_seq, k_pool, k_params = jax.random.split(key, 3)
    sequence_output = jax.random.normal(k_seq, (B, S, H), jnp.float32)
    pooled_output = jax.random.normal(k_pool, (B, H), jnp.float32)
    params = init_params(k_params, H, V)
    prepared = prepare_params(params)   # pad + cast ONCE, outside the step

    pred_scores, seq_rel = bert_pretraining_heads(sequence_output, pooled_output, prepared)
    jax.block_until_ready((pred_scores, seq_rel))

    ref_pred, ref_nsp = reference(sequence_output, pooled_output, params)
    assert pred_scores.shape == (B, S, V)
    assert seq_rel.shape == (B, 2)
    # MLM head uses bf16 MXU operands / bf16 logits with f32 accumulation.
    assert jnp.allclose(pred_scores.astype(jnp.float32), ref_pred, atol=2e-2, rtol=2e-2)
    # NSP head is pure f32 -> tight tolerance.
    assert jnp.allclose(seq_rel, ref_nsp, atol=1e-4, rtol=1e-4)

    print("KERNEL_OK")
</pallas_src>

<mosaic_0001>
module attributes {stable_mosaic.version = 11 : i64} {
  func.func @transform_nsp_kernel(%arg0: i32, %arg1: memref<16x32xf32, #tpu.memory_space<vmem>>, %arg2: memref<32x32xbf16, #tpu.memory_space<vmem>>, %arg3: memref<1x32xf32, #tpu.memory_space<vmem>>, %arg4: memref<1x32xf32, #tpu.memory_space<vmem>>, %arg5: memref<1x32xf32, #tpu.memory_space<vmem>>, %arg6: memref<2x32xf32, #tpu.memory_space<vmem>>, %arg7: memref<32x128xf32, #tpu.memory_space<vmem>>, %arg8: memref<1x128xf32, #tpu.memory_space<vmem>>, %arg9: memref<16x32xbf16, #tpu.memory_space<vmem>>, %arg10: memref<2x128xf32, #tpu.memory_space<vmem>>) attributes {dimension_semantics = [#tpu.dimension_semantics<arbitrary>], iteration_bounds = array<i64: 1>, scalar_prefetch = 0 : i64, scratch_operands = 0 : i64, tpu.core_type = #tpu.core_type<tc>, window_params = [{transform_indices = @transform_0, window_bounds = array<i64: 16, 32>}, {pipeline_mode = #tpu.pipeline_mode<synchronous>, transform_indices = @transform_1, window_bounds = array<i64: 32, 32>}, {pipeline_mode = #tpu.pipeline_mode<synchronous>, transform_indices = @transform_2, window_bounds = array<i64: 1, 32>}, {pipeline_mode = #tpu.pipeline_mode<synchronous>, transform_indices = @transform_3, window_bounds = array<i64: 1, 32>}, {pipeline_mode = #tpu.pipeline_mode<synchronous>, transform_indices = @transform_4, window_bounds = array<i64: 1, 32>}, {pipeline_mode = #tpu.pipeline_mode<synchronous>, transform_indices = @transform_5, window_bounds = array<i64: 2, 32>}, {pipeline_mode = #tpu.pipeline_mode<synchronous>, transform_indices = @transform_6, window_bounds = array<i64: 32, 128>}, {pipeline_mode = #tpu.pipeline_mode<synchronous>, transform_indices = @transform_7, window_bounds = array<i64: 1, 128>}, {transform_indices = @transform_8, window_bounds = array<i64: 16, 32>}, {pipeline_mode = #tpu.pipeline_mode<synchronous>, transform_indices = @transform_9, window_bounds = array<i64: 2, 128>}]} {
    %c0 = arith.constant 0 : index
    %c0_0 = arith.constant 0 : index
    %0 = vector.load %arg1[%c0, %c0_0] : memref<16x32xf32, #tpu.memory_space<vmem>>, vector<16x32xf32>
    %1 = arith.truncf %0 : vector<16x32xf32> to vector<16x32xbf16>
    %c0_1 = arith.constant 0 : index
    %c0_2 = arith.constant 0 : index
    %2 = vector.load %arg2[%c0_1, %c0_2] : memref<32x32xbf16, #tpu.memory_space<vmem>>, vector<32x32xbf16>
    %cst = arith.constant dense<0.000000e+00> : vector<16x32xf32>
    %3 = tpu.matmul %1, %2, %cst {dimension_numbers = #tpu.dot_dimension_numbers<[1], [0], [0], [1], [0, 0, 1, 1], [], []>} : vector<16x32xbf16>, vector<32x32xbf16>, vector<16x32xf32> -> vector<16x32xf32>
    %c0_3 = arith.constant 0 : index
    %c0_4 = arith.constant 0 : index
    %4 = vector.load %arg3[%c0_3, %c0_4] : memref<1x32xf32, #tpu.memory_space<vmem>>, vector<1x32xf32>
    %5 = vector.broadcast %4 : vector<1x32xf32> to vector<16x32xf32>
    %6 = arith.addf %3, %5 : vector<16x32xf32>
    %cst_5 = arith.constant 5.000000e-01 : f32
    %7 = vector.broadcast %cst_5 : f32 to vector<16x32xf32>
    %8 = arith.mulf %7, %6 : vector<16x32xf32>
    %cst_6 = arith.constant 0.707106769 : f32
    %9 = vector.broadcast %cst_6 : f32 to vector<16x32xf32>
    %10 = arith.mulf %6, %9 : vector<16x32xf32>
    %11 = math.erf %10 : vector<16x32xf32>
    %cst_7 = arith.constant 1.000000e+00 : f32
    %12 = vector.broadcast %cst_7 : f32 to vector<16x32xf32>
    %13 = arith.addf %12, %11 : vector<16x32xf32>
    %14 = arith.mulf %8, %13 : vector<16x32xf32>
    %cst_8 = arith.constant dense<0.000000e+00> : vector<16xf32>
    %15 = vector.multi_reduction <add>, %14, %cst_8 [1] : vector<16x32xf32> to vector<16xf32>
    %16 = vector.shape_cast %15 : vector<16xf32> to vector<16x1xf32>
    %cst_9 = arith.constant 3.200000e+01 : f32
    %17 = vector.broadcast %cst_9 : f32 to vector<16x1xf32>
    %18 = arith.divf %16, %17 : vector<16x1xf32>
    %19 = vector.broadcast %18 : vector<16x1xf32> to vector<16x32xf32>
    %20 = arith.subf %14, %19 : vector<16x32xf32>
    %21 = arith.mulf %20, %20 : vector<16x32xf32>
    %cst_10 = arith.constant dense<0.000000e+00> : vector<16xf32>
    %22 = vector.multi_reduction <add>, %21, %cst_10 [1] : vector<16x32xf32> to vector<16xf32>
    %23 = vector.shape_cast %22 : vector<16xf32> to vector<16x1xf32>
    %cst_11 = arith.constant 3.200000e+01 : f32
    %24 = vector.broadcast %cst_11 : f32 to vector<16x1xf32>
    %25 = arith.divf %23, %24 : vector<16x1xf32>
    %cst_12 = arith.constant 9.99999996E-13 : f32
    %26 = vector.broadcast %cst_12 : f32 to vector<16x1xf32>
    %27 = arith.addf %25, %26 : vector<16x1xf32>
    %28 = math.rsqrt %27 : vector<16x1xf32>
    %29 = vector.broadcast %28 : vector<16x1xf32> to vector<16x32xf32>
    %30 = arith.mulf %20, %29 : vector<16x32xf32>
    %c0_13 = arith.constant 0 : index
    %c0_14 = arith.constant 0 : index
    %31 = vector.load %arg4[%c0_13, %c0_14] : memref<1x32xf32, #tpu.memory_space<vmem>>, vector<1x32xf32>
    %32 = vector.broadcast %31 : vector<1x32xf32> to vector<16x32xf32>
    %33 = arith.mulf %30, %32 : vector<16x32xf32>
    %c0_15 = arith.constant 0 : index
    %c0_16 = arith.constant 0 : index
    %34 = vector.load %arg5[%c0_15, %c0_16] : memref<1x32xf32, #tpu.memory_space<vmem>>, vector<1x32xf32>
    %35 = vector.broadcast %34 : vector<1x32xf32> to vector<16x32xf32>
    %36 = arith.addf %33, %35 : vector<16x32xf32>
    %37 = arith.truncf %36 : vector<16x32xf32> to vector<16x32xbf16>
    %c0_17 = arith.constant 0 : index
    %c0_18 = arith.constant 0 : index
    %38 = vector.load %arg9[%c0_17, %c0_18] : memref<16x32xbf16, #tpu.memory_space<vmem>>, vector<16x32xbf16>
    tpu.vector_store %arg9[%c0_17, %c0_18], %37 {strides = array<i32>} : memref<16x32xbf16, #tpu.memory_space<vmem>>, vector<16x32xbf16>,
    %c0_i32 = arith.constant 0 : i32
    %39 = arith.cmpi eq, %arg0, %c0_i32 : i32
    %40 = arith.extui %39 : i1 to i32
    %c0_i32_19 = arith.constant 0 : i32
    %41 = arith.cmpi ne, %40, %c0_i32_19 : i32
    scf.if %41 {
      %c0_20 = arith.constant 0 : index
      %c0_21 = arith.constant 0 : index
      %42 = vector.load %arg6[%c0_20, %c0_21] : memref<2x32xf32, #tpu.memory_space<vmem>>, vector<2x32xf32>
      %c0_22 = arith.constant 0 : index
      %c0_23 = arith.constant 0 : index
      %43 = vector.load %arg7[%c0_22, %c0_23] : memref<32x128xf32, #tpu.memory_space<vmem>>, vector<32x128xf32>
      %cst_24 = arith.constant dense<0.000000e+00> : vector<2x128xf32>
      %44 = tpu.matmul %42, %43, %cst_24 {dimension_numbers = #tpu.dot_dimension_numbers<[1], [0], [0], [1], [0, 0, 1, 1], [], []>} : vector<2x32xf32>, vector<32x128xf32>, vector<2x128xf32> -> vector<2x128xf32>
      %c0_25 = arith.constant 0 : index
      %c0_26 = arith.constant 0 : index
      %45 = vector.load %arg8[%c0_25, %c0_26] : memref<1x128xf32, #tpu.memory_space<vmem>>, vector<1x128xf32>
      %46 = vector.broadcast %45 : vector<1x128xf32> to vector<2x128xf32>
      %47 = arith.addf %44, %46 : vector<2x128xf32>
      %c0_27 = arith.constant 0 : index
      %c0_28 = arith.constant 0 : index
      %48 = vector.load %arg10[%c0_27, %c0_28] : memref<2x128xf32, #tpu.memory_space<vmem>>, vector<2x128xf32>
      tpu.vector_store %arg10[%c0_27, %c0_28], %47 {strides = array<i32>} : memref<2x128xf32, #tpu.memory_space<vmem>>, vector<2x128xf32>,
    } else {
    }
    return
  }
  func.func @transform_0(%arg0: i32) -> (i32, i32) {
    %c0_i32 = arith.constant 0 : i32
    %c0_i32_0 = arith.constant 0 : i32
    return %arg0, %c0_i32 : i32, i32
  }
  func.func @transform_1(%arg0: i32) -> (i32, i32) {
    %c0_i32 = arith.constant 0 : i32
    %c0_i32_0 = arith.constant 0 : i32
    %c0_i32_1 = arith.constant 0 : i32
    return %c0_i32, %c0_i32_0 : i32, i32
  }
  func.func @transform_2(%arg0: i32) -> (i32, i32) {
    %c0_i32 = arith.constant 0 : i32
    %c0_i32_0 = arith.constant 0 : i32
    %c0_i32_1 = arith.constant 0 : i32
    return %c0_i32, %c0_i32_0 : i32, i32
  }
  func.func @transform_3(%arg0: i32) -> (i32, i32) {
    %c0_i32 = arith.constant 0 : i32
    %c0_i32_0 = arith.constant 0 : i32
    %c0_i32_1 = arith.constant 0 : i32
    return %c0_i32, %c0_i32_0 : i32, i32
  }
  func.func @transform_4(%arg0: i32) -> (i32, i32) {
    %c0_i32 = arith.constant 0 : i32
    %c0_i32_0 = arith.constant 0 : i32
    %c0_i32_1 = arith.constant 0 : i32
    return %c0_i32, %c0_i32_0 : i32, i32
  }
  func.func @transform_5(%arg0: i32) -> (i32, i32) {
    %c0_i32 = arith.constant 0 : i32
    %c0_i32_0 = arith.constant 0 : i32
    %c0_i32_1 = arith.constant 0 : i32
    return %c0_i32, %c0_i32_0 : i32, i32
  }
  func.func @transform_6(%arg0: i32) -> (i32, i32) {
    %c0_i32 = arith.constant 0 : i32
    %c0_i32_0 = arith.constant 0 : i32
    %c0_i32_1 = arith.constant 0 : i32
    return %c0_i32, %c0_i32_0 : i32, i32
  }
  func.func @transform_7(%arg0: i32) -> (i32, i32) {
    %c0_i32 = arith.constant 0 : i32
    %c0_i32_0 = arith.constant 0 : i32
    %c0_i32_1 = arith.constant 0 : i32
    return %c0_i32, %c0_i32_0 : i32, i32
  }
  func.func @transform_8(%arg0: i32) -> (i32, i32) {
    %c0_i32 = arith.constant 0 : i32
    %c0_i32_0 = arith.constant 0 : i32
    return %arg0, %c0_i32 : i32, i32
  }
  func.func @transform_9(%arg0: i32) -> (i32, i32) {
    %c0_i32 = arith.constant 0 : i32
    %c0_i32_0 = arith.constant 0 : i32
    %c0_i32_1 = arith.constant 0 : i32
    return %c0_i32, %c0_i32_0 : i32, i32
  }
}

</mosaic_0001>

<llo_original>
// kernel: tpu_custom_call.1
$region0: #{tpu_custom_call.1}
  #allocation0 [shape = 'u32[]', space=smem, size = 0x4, offset = 0x4, fixed_abs, tag = 'smem constant byte address 0x4 - core index']
  #allocation1 [shape = 'u32[144,128]{1,0:T(1,128)}', space=vmem, size = 0x12000, scoped, tag = 'internal scratch']
  %s0 = inlined_call_operand.hbm [shape: f32[16,32], index: 0, kind: input, shape index: {}]
  %s1 = inlined_call_operand.hbm [shape: bf16[32,32], index: 1, kind: input, shape index: {}]
  %s2 = inlined_call_operand.vmem [shape: f32[1,32], index: 2, kind: input, shape index: {}]
  %s3 = inlined_call_operand.vmem [shape: f32[1,32], index: 3, kind: input, shape index: {}]
  %s4 = inlined_call_operand.vmem [shape: f32[1,32], index: 4, kind: input, shape index: {}]
  %s5 = inlined_call_operand.vmem [shape: f32[2,32], index: 5, kind: input, shape index: {}]
  %s6 = inlined_call_operand.hbm [shape: f32[32,128], index: 6, kind: input, shape index: {}]
  %s7 = inlined_call_operand.vmem [shape: f32[1,128], index: 7, kind: input, shape index: {}]
  %s8 = inlined_call_operand.hbm [shape: bf16[16,32], index: 8, kind: output, shape index: {0}]
  %s9 = inlined_call_operand.hbm [shape: f32[2,128], index: 9, kind: output, shape index: {1}]
  %10 = xla_tuple %s8, %s9
  %s11 = sld [smem:[#allocation0]]
  $region66: #{tpu_custom_call.1} parent=0
    _
  %s13 = ssub.s32 1, %s11
  %s14 = scalar_select 0, %s13, %s11
  $region1: #{tpu_custom_call.1} parent=0
    #allocation2 [shape = 'u8[8192]{0}', space=vmem, size = 0x2000, scoped, tag = 'input window, operand 0, single buffered']
    #allocation3 [shape = 's32[1]{0}', space=sflag, size = 0x4, scoped, tag = 'scoped memory for tpu_custom_call.1']
    #allocation4 [shape = 's32[1]{0}', space=sflag, size = 0x4, scoped, tag = 'scoped memory for tpu_custom_call.1']
    #allocation5 [shape = 'u8[8192]{0}', space=vmem, size = 0x2000, scoped, tag = 'input window, operand 1, single buffered']
    #allocation6 [shape = 's32[1]{0}', space=sflag, size = 0x4, scoped, tag = 'scoped memory for tpu_custom_call.1']
    #allocation7 [shape = 'u8[16384]{0}', space=vmem, size = 0x4000, scoped, tag = 'input window, operand 6, single buffered']
    #allocation8 [shape = 'u8[4096]{0}', space=vmem, size = 0x1000, scoped, tag = 'output window, operand 0, single buffered']
    #allocation9 [shape = 'u8[1024]{0}', space=vmem, size = 0x400, scoped, tag = 'output window, operand 1, single buffered']
    #allocation10 [shape = 's32[1]{0}', space=sflag, size = 0x4, scoped, tag = 'scoped memory for tpu_custom_call.1']
    %15 = vsyncpa [#allocation3], 0
    %16 = vsyncpa [#allocation6], 0
    %17 = vsyncpa [#allocation4], 0
    %18 = vsyncpa [#allocation10], 0
    // Predicated region
    $region2: #{tpu_custom_call.1} parent=1 // pred_check
      _
    $region3: #{tpu_custom_call.1} parent=1 // pred_check_branch
      %20 = sbr.rel (0) target = $region5
    $region4: #{tpu_custom_call.1} parent=1 // pred_region
      %s22 = ssub.s32 256, 256
      %23 = vsyncadd [#allocation3], %s22
      %s24 = sshll.u32 [#allocation2], 4
      %s25 = int_to_ptr.vmem [resolvable:$true] %s24
      %30 = dma.hbm_to_vmem [thread:$0]  %s0, 256, %s25, [#allocation3], 128, 128, 8
    $region5: #{tpu_custom_call.1} parent=1 // pred_fallthru
      _
    // Predicated region
    $region6: #{tpu_custom_call.1} parent=1 // pred_check
      _
    $region7: #{tpu_custom_call.1} parent=1 // pred_check_branch
      %32 = sbr.rel (0) target = $region9
    $region8: #{tpu_custom_call.1} parent=1 // pred_region
      %s34 = ssub.s32 256, 256
      %35 = vsyncadd [#allocation6], %s34
      %s36 = sshll.u32 [#allocation5], 4
      %s37 = int_to_ptr.vmem [resolvable:$true] %s36
      %42 = dma.hbm_to_vmem [thread:$0]  %s1, 256, %s37, [#allocation6], 64, 64, 4
    $region9: #{tpu_custom_call.1} parent=1 // pred_fallthru
      _
    // Predicated region
    $region10: #{tpu_custom_call.1} parent=1 // pred_check
      _
    $region11: #{tpu_custom_call.1} parent=1 // pred_check_branch
      %44 = sbr.rel (0) target = $region13
    $region12: #{tpu_custom_call.1} parent=1 // pred_region
      _
    $region13: #{tpu_custom_call.1} parent=1 // pred_fallthru
      _
    // Predicated region
    $region14: #{tpu_custom_call.1} parent=1 // pred_check
      _
    $region15: #{tpu_custom_call.1} parent=1 // pred_check_branch
      %46 = sbr.rel (0) target = $region17
    $region16: #{tpu_custom_call.1} parent=1 // pred_region
      _
    $region17: #{tpu_custom_call.1} parent=1 // pred_fallthru
      _
    // Predicated region
    $region18: #{tpu_custom_call.1} parent=1 // pred_check
      _
    $region19: #{tpu_custom_call.1} parent=1 // pred_check_branch
      %48 = sbr.rel (0) target = $region21
    $region20: #{tpu_custom_call.1} parent=1 // pred_region
      _
    $region21: #{tpu_custom_call.1} parent=1 // pred_fallthru
      _
    // Predicated region
    $region22: #{tpu_custom_call.1} parent=1 // pred_check
      _
    $region23: #{tpu_custom_call.1} parent=1 // pred_check_branch
      %50 = sbr.rel (0) target = $region25
    $region24: #{tpu_custom_call.1} parent=1 // pred_region
      _
    $region25: #{tpu_custom_call.1} parent=1 // pred_fallthru
      _
    // Predicated region
    $region26: #{tpu_custom_call.1} parent=1 // pred_check
      _
    $region27: #{tpu_custom_call.1} parent=1 // pred_check_branch
      %52 = sbr.rel (0) target = $region29
    $region28: #{tpu_custom_call.1} parent=1 // pred_region
      %s54 = ssub.s32 512, 512
      %55 = vsyncadd [#allocation6], %s54
      %s56 = sshll.u32 [#allocation7], 4
      %s57 = int_to_ptr.vmem [resolvable:$true] %s56
      %62 = dma.hbm_to_vmem [thread:$0]  %s6, 512, %s57, [#allocation6], 128, 128, 8
    $region29: #{tpu_custom_call.1} parent=1 // pred_fallthru
      _
    // Predicated region
    $region30: #{tpu_custom_call.1} parent=1 // pred_check
      _
    $region31: #{tpu_custom_call.1} parent=1 // pred_check_branch
      %64 = sbr.rel (0) target = $region33
    $region32: #{tpu_custom_call.1} parent=1 // pred_region
      _
    $region33: #{tpu_custom_call.1} parent=1 // pred_fallthru
      _
    // Predicated region
    $region34: #{tpu_custom_call.1} parent=1 // pred_check
      _
    $region35: #{tpu_custom_call.1} parent=1 // pred_check_branch
      %66 = sbr.rel (0) target = $region37
    $region36: #{tpu_custom_call.1} parent=1 // pred_region
      %67 = dma.done [#allocation3], 256
    $region37: #{tpu_custom_call.1} parent=1 // pred_fallthru
      _
    // Predicated region
    $region38: #{tpu_custom_call.1} parent=1 // pred_check
      _
    $region39: #{tpu_custom_call.1} parent=1 // pred_check_branch
      %69 = sbr.rel (0) target = $region41
    $region40: #{tpu_custom_call.1} parent=1 // pred_region
      %70 = dma.done [#allocation6], 256
    $region41: #{tpu_custom_call.1} parent=1 // pred_fallthru
      _
    // Predicated region
    $region42: #{tpu_custom_call.1} parent=1 // pred_check
      _
    $region43: #{tpu_custom_call.1} parent=1 // pred_check_branch
      %72 = sbr.rel (0) target = $region45
    $region44: #{tpu_custom_call.1} parent=1 // pred_region
      %73 = dma.done [#allocation6], 512
    $region45: #{tpu_custom_call.1} parent=1 // pred_fallthru
      _
    %v75 = vld [vmem:[#allocation2] sm:$0xff]
    %v76 = vld [vmem:[#allocation2 + $0x8] sm:$0xff]
    %v77 = vpack.c.bf16 %v76, %v75
    %v78 = vld [vmem:[#allocation5] sm:$0xf]
    %v79 = vld [vmem:[#allocation5 + $0x4] sm:$0xf]
    %v80 = vld [vmem:[#allocation5 + $0x8] sm:$0xf]
    %v81 = vld [vmem:[#allocation5 + $0xc] sm:$0xf]
    %v82 = vld [vmem:[%s2] sm:$0x1]
    %v84 = vlaneseq
    %v85 = vshrl.u32 %v84, 7
    %v86 = vsub.s32 0, %v85
    %v87 = vrot.slane %v82, %v86
    %v93 = vunpack.c.l.b16 %v78
    %v94 = vunpack.c.l.b16 %v79
    %v95 = vunpack.c.l.b16 %v80
    %v96 = vunpack.c.l.b16 %v81
    %v97 = vpack.c.b16 %v94, %v93
    %v98 = vpack.c.b16 %v96, %v95
    %vm101 = vcmask 261120
    %v103 = vsel %vm101, %v77, 0
    %105 = vmatprep.subr.bf16.mxu0 0
    %106 = vmatpush1.bf16.msra.mxu0 0
    %107 = vmatprep.subr.bf16.mxu0 0
    %108 = vmatpush1.bf16.msra.mxu0 0
    %109 = vmatprep.subr.bf16.mxu0 0
    %110 = vmatpush1.bf16.msra.mxu0 0
    %111 = vmatprep.subr.bf16.mxu0 0
    %112 = vmatpush1.bf16.msra.mxu0 0
    %113 = vmatprep.subr.bf16.mxu0 0
    %114 = vmatpush1.bf16.msra.mxu0 0
    %115 = vmatprep.subr.bf16.mxu0 0
    %116 = vmatpush1.bf16.msra.mxu0 0
    %117 = vmatprep.subr.bf16.mxu0 0
    %118 = vmatpush1.bf16.msra.mxu0 %v98
    %119 = vmatprep.subr.bf16.mxu0 0
    %120 = vmatpush1.bf16.msra.mxu0 %v97
    %121 = vmatprep.subr.bf16.mxu0 0
    %122 = vmatpush2.bf16.msra.mxu0 0
    %123 = vmatprep.subr.bf16.mxu0 0
    %124 = vmatpush2.bf16.msra.mxu0 0
    %125 = vmatprep.subr.bf16.mxu0 0
    %126 = vmatpush2.bf16.msra.mxu0 0
    %127 = vmatprep.subr.bf16.mxu0 0
    %128 = vmatpush2.bf16.msra.mxu0 0
    %129 = vmatprep.subr.bf16.mxu0 0
    %130 = vmatpush2.bf16.msra.mxu0 0
    %131 = vmatprep.subr.bf16.mxu0 0
    %132 = vmatpush2.bf16.msra.mxu0 0
    %133 = vmatprep.subr.bf16.mxu0 0
    %134 = vmatpush2.bf16.msra.mxu0 0
    %135 = vmatprep.subr.bf16.mxu0 0
    %136 = vmatpush2.bf16.msra.mxu0 0
    %137 = vmatprep.mubr.bf16.mxu0 0
    %138 = vmatmul.mubr.bf16.gmra.mxu0 %v103
    %v139 = vpop.f32.mrf.mxu0
    %v140 = vadd.f32 %v87, %v139
    %v141 = vpop.f32.mrf.mxu0
    %v142 = vpop.f32.mrf.mxu0
    %v143 = vadd.f32 %v87, %v142
    %v144 = vpop.f32.mrf.mxu0
    %145 = vdwg.mxu0
    %v146 = vmul.f32 %v140, 0.5
    %v147 = vmul.f32 %v143, 0.5
    %v148 = vmul.f32 %v140, 0.70710677
    %v149 = vmul.f32 %v143, 0.70710677
    %v150 = verf.f32.pop %v148
    %v151 = verf.f32.pop %v149
    %v152 = vadd.f32 %v150, 1.0
    %v153 = vadd.f32 %v151, 1.0
    %v154 = vmul.f32 %v146, %v152
    %v155 = vmul.f32 %v147, %v153
    %v156 = vsel %vm101, %v154, 0.0
    %157 = vadd.xlane.f32.xlu0 %v156
    %v158 = vpop.xlane.xlu0 %157
    %v159 = vsel %vm101, %v155, 0.0
    %160 = vadd.xlane.f32.xlu0 %v159
    %v161 = vpop.xlane.xlu0 %160
    %v162 = vrcp.pop 32.0
    %v163 = vmul.f32 %v158, %v162
    %v164 = vmul.f32 %v161, %v162
    %v165 = vsub.f32 %v154, %v163
    %v166 = vsub.f32 %v155, %v164
    %v167 = vmul.f32 %v165, %v165
    %v168 = vmul.f32 %v166, %v166
    %v169 = vsel %vm101, %v167, 0.0
    %170 = vadd.xlane.f32.xlu0 %v169
    %v171 = vpop.xlane.xlu0 %170
    %v172 = vsel %vm101, %v168, 0.0
    %173 = vadd.xlane.f32.xlu0 %v172
    %v174 = vpop.xlane.xlu0 %173
    %v175 = vmul.f32 %v171, %v162
    %v176 = vmul.f32 %v174, %v162
    %v177 = vadd.f32 %v175, 1e-12
    %v178 = vadd.f32 %v176, 1e-12
    %v179 = vrsqrt.pop %v177
    %v180 = vrsqrt.pop %v178
    %v181 = vmul.f32 %v165, %v179
    %v182 = vmul.f32 %v166, %v180
    %v183 = vld [vmem:[%s3] sm:$0x1]
    %v185 = vlaneseq
    %v186 = vshrl.u32 %v185, 7
    %v187 = vsub.s32 0, %v186
    %v188 = vrot.slane %v183, %v187
    %v190 = vmul.f32 %v181, %v188
    %v191 = vmul.f32 %v182, %v188
    %v192 = vld [vmem:[%s4] sm:$0x1]
    %v194 = vlaneseq
    %v195 = vshrl.u32 %v194, 7
    %v196 = vsub.s32 0, %v195
    %v197 = vrot.slane %v192, %v196
    %v199 = vadd.f32 %v190, %v197
    %v200 = vadd.f32 %v191, %v197
    %v201 = vpack.c.bf16 %v200, %v199
    %v203 = vunpack.c.l.b16 %v201
    %v204 = vunpack.c.h.b16 %v201
    %v205 = vpack.c.b16 %v203, %v203
    %v206 = vpack.c.b16 %v204, %v204
    %vm209 = vcmask 257024
    %210 = vst.msk [vmem:[#allocation8] sm:$0xf] %vm209, %v205
    %211 = vst.msk [vmem:[#allocation8 + $0x4] sm:$0xf] %vm209, %v206
    %p212 = scmp.eq.s32.totalorder 0, 0
    // Predicated region
    $region46: #{tpu_custom_call.1} parent=1 // pred_check
      %p213 = pneg %p212
    $region47: #{tpu_custom_call.1} parent=1 // pred_check_branch
      %215 = sbr.rel (%p213) target = $region49
    $region48: #{tpu_custom_call.1} parent=1 // pred_region
      %v216 = vld [vmem:[%s5] sm:$0x3]
      %v217 = vld [vmem:[#allocation7] sm:$0xff]
      %v218 = vld [vmem:[#allocation7 + $0x8] sm:$0xff]
      %v219 = vld [vmem:[#allocation7 + $0x10] sm:$0xff]
      %v220 = vld [vmem:[#allocation7 + $0x18] sm:$0xff]
      %v221 = vld [vmem:[%s7] sm:$0x1]
      %v223 = vlaneseq
      %v224 = vshrl.u32 %v223, 7
      %v225 = vsub.s32 0, %v224
      %v226 = vrot.slane %v221, %v225
      %v229 = vsel %vm101, %v216, 0
      %231 = vmatprep.subr.mxu0 0.0
      %232 = vmatpush1.msra.mxu0 0.0
      %233 = vmatprep.subr.mxu0 0.0
      %234 = vmatpush1.msra.mxu0 0.0
      %235 = vmatprep.subr.mxu0 0.0
      %236 = vmatpush1.msra.mxu0 0.0
      %237 = vmatprep.subr.mxu0 0.0
      %238 = vmatpush1.msra.mxu0 0.0
      %239 = vmatprep.subr.mxu0 0.0
      %240 = vmatpush1.msra.mxu0 0.0
      %241 = vmatprep.subr.mxu0 0.0
      %242 = vmatpush1.msra.mxu0 0.0
      %243 = vmatprep.subr.mxu0 0.0
      %244 = vmatpush1.msra.mxu0 0.0
      %245 = vmatprep.subr.mxu0 0.0
      %246 = vmatpush1.msra.mxu0 0.0
      %247 = vmatprep.subr.mxu0 0.0
      %248 = vmatpush1.msra.mxu0 0.0
      %249 = vmatprep.subr.mxu0 0.0
      %250 = vmatpush1.msra.mxu0 0.0
      %251 = vmatprep.subr.mxu0 0.0
      %252 = vmatpush1.msra.mxu0 0.0
      %253 = vmatprep.subr.mxu0 0.0
      %254 = vmatpush1.msra.mxu0 0.0
      %255 = vmatprep.subr.mxu0 0.0
      %256 = vmatpush1.msra.mxu0 %v220
      %257 = vmatprep.subr.mxu0 0.0
      %258 = vmatpush1.msra.mxu0 %v219
      %259 = vmatprep.subr.mxu0 0.0
      %260 = vmatpush1.msra.mxu0 %v218
      %261 = vmatprep.subr.mxu0 0.0
      %262 = vmatpush1.msra.mxu0 %v217
      %263 = vmatprep.subr.mxu0 0.0
      %264 = vmatpush2.msra.mxu0 0.0
      %265 = vmatprep.subr.mxu0 0.0
      %266 = vmatpush2.msra.mxu0 0.0
      %267 = vmatprep.subr.mxu0 0.0
      %268 = vmatpush2.msra.mxu0 0.0
      %269 = vmatprep.subr.mxu0 0.0
      %270 = vmatpush2.msra.mxu0 0.0
      %271 = vmatprep.subr.mxu0 0.0
      %272 = vmatpush2.msra.mxu0 0.0
      %273 = vmatprep.subr.mxu0 0.0
      %274 = vmatpush2.msra.mxu0 0.0
      %275 = vmatprep.subr.mxu0 0.0
      %276 = vmatpush2.msra.mxu0 0.0
      %277 = vmatprep.subr.mxu0 0.0
      %278 = vmatpush2.msra.mxu0 0.0
      %279 = vmatprep.subr.mxu0 0.0
      %280 = vmatpush2.msra.mxu0 0.0
      %281 = vmatprep.subr.mxu0 0.0
      %282 = vmatpush2.msra.mxu0 0.0
      %283 = vmatprep.subr.mxu0 0.0
      %284 = vmatpush2.msra.mxu0 0.0
      %285 = vmatprep.subr.mxu0 0.0
      %286 = vmatpush2.msra.mxu0 0.0
      %287 = vmatprep.subr.mxu0 0.0
      %288 = vmatpush2.msra.mxu0 0.0
      %289 = vmatprep.subr.mxu0 0.0
      %290 = vmatpush2.msra.mxu0 0.0
      %291 = vmatprep.subr.mxu0 0.0
      %292 = vmatpush2.msra.mxu0 0.0
      %293 = vmatprep.subr.mxu0 0.0
      %294 = vmatpush2.msra.mxu0 0.0
      %295 = vmatprep.mubr.f32.mxu0 0.0
      %296 = vmatmul.mubr.f32.gmra.mxu0 %v229
      %v297 = vpop.f32.mrf.mxu0
      %v298 = vadd.f32 %v226, %v297
      %v299 = vpop.f32.mrf.mxu0
      %300 = vdwg.mxu0
      %301 = vst [vmem:[#allocation9] sm:$0x3] %v298
    $region49: #{tpu_custom_call.1} parent=1 // pred_fallthru
      _
    // Predicated region
    $region50: #{tpu_custom_call.1} parent=1 // pred_check
      _
    $region51: #{tpu_custom_call.1} parent=1 // pred_check_branch
      %303 = sbr.rel (0) target = $region53
    $region52: #{tpu_custom_call.1} parent=1 // pred_region
      %s305 = ssub.s32 128, 128
      %306 = vsyncadd [#allocation4], %s305
      %s307 = sshll.u32 [#allocation8], 4
      %s308 = int_to_ptr.vmem [resolvable:$true] %s307
      %313 = dma.vmem_to_hbm [thread:$0]  %s308, 128, %s8, [#allocation4], 64, 64, 4
    $region53: #{tpu_custom_call.1} parent=1 // pred_fallthru
      _
    // Predicated region
    $region54: #{tpu_custom_call.1} parent=1 // pred_check
      _
    $region55: #{tpu_custom_call.1} parent=1 // pred_check_branch
      %315 = sbr.rel (0) target = $region57
    $region56: #{tpu_custom_call.1} parent=1 // pred_region
      %s317 = ssub.s32 32, 32
      %318 = vsyncadd [#allocation10], %s317
      %s320 = sshll.u32 [#allocation9], 4
      %s321 = int_to_ptr.vmem [resolvable:$true] %s320
      %323 = dma.vmem_to_hbm [thread:$0]  %s321, 32, %s9, [#allocation10]
    $region57: #{tpu_custom_call.1} parent=1 // pred_fallthru
      _
    // Predicated region
    $region58: #{tpu_custom_call.1} parent=1 // pred_check
      _
    $region59: #{tpu_custom_call.1} parent=1 // pred_check_branch
      %325 = sbr.rel (0) target = $region61
    $region60: #{tpu_custom_call.1} parent=1 // pred_region
      %326 = dma.done [#allocation4], 128
    $region61: #{tpu_custom_call.1} parent=1 // pred_fallthru
      _
    // Predicated region
    $region62: #{tpu_custom_call.1} parent=1 // pred_check
      _
    $region63: #{tpu_custom_call.1} parent=1 // pred_check_branch
      %328 = sbr.rel (0) target = $region65
    $region64: #{tpu_custom_call.1} parent=1 // pred_region
      %329 = dma.done [#allocation10], 32
    $region65: #{tpu_custom_call.1} parent=1 // pred_fallthru
      _
    %330 = vsyncpa [#allocation3], 1
    %331 = vsyncpa [#allocation6], 1
    %332 = vsyncpa [#allocation4], 1
    %333 = vsyncpa [#allocation10], 1

</llo_original>
